<compile_context>
chip_gen: v7x
topology: tpu7x:2x2x1
jax: 0.10.0
libtpu: 0.0.40
codegen_flags: <defaults>
</compile_context>

<pallas_src>
import jax
import jax.numpy as jnp
from jax.experimental import pallas as pl
from jax.experimental.pallas import tpu as pltpu


N_STATES = 3
N_ACTIONS = 5
H1 = 64
H2 = 32
LANES = 128

# Packed-parameter row layout (all section starts are multiples of 8 rows).
W1_R = 0      # rows   0..2   : w1 (3, 64)   in cols 0..63
B1_R = 8      # row    8      : b1 (64,)     in cols 0..63
W2_R = 16     # rows  16..143 : w2 (64, 32)  in rows 16..79, cols 0..31 (rest 0)
B2_R = 144    # row   144     : b2 (32,)     in cols 0..31
W3_R = 152    # rows 152..279 : w3 (32, 5)   in rows 152..183, cols 0..4 (rest 0)
B3_R = 280    # row   280     : b3 (5,)      in cols 0..4
P_ROWS = 288  # total packed rows -> (288, 128) f32 = 144 KiB, one DMA


def _round_up(x, m):
    return (x + m - 1) // m * m


def _mlp_kernel(x_ref, p_ref, o_ref):
    # x_ref: (TB, N_STATES); p_ref: (P_ROWS, 128); o_ref: (TB, N_ACTIONS)
    x = x_ref[...]

    # fc1 (K=3): VPU broadcast-FMAs instead of a padded MXU contraction.
    # Padded lanes (cols 64..127) stay exactly zero through the ReLU.
    a = (x[:, 0:1] * p_ref[W1_R + 0:W1_R + 1, :]
         + x[:, 1:2] * p_ref[W1_R + 1:W1_R + 2, :]
         + x[:, 2:3] * p_ref[W1_R + 2:W1_R + 3, :]
         + p_ref[B1_R:B1_R + 1, :])
    a = jnp.maximum(a, 0.0)                                   # (TB, 128)

    # fc2: lane-dense 128x128 weight block (rows/cols beyond 64/32 are zero).
    a = jnp.dot(a, p_ref[W2_R:W2_R + LANES, :],
                preferred_element_type=jnp.float32)
    a = jnp.maximum(a + p_ref[B2_R:B2_R + 1, :], 0.0)         # (TB, 128)

    # fc3: lane-dense weight block; only the first N_ACTIONS cols are non-zero.
    q = jnp.dot(a, p_ref[W3_R:W3_R + LANES, :],
                preferred_element_type=jnp.float32)
    q = q + p_ref[B3_R:B3_R + 1, :]

    o_ref[...] = q[:, :N_ACTIONS].astype(o_ref.dtype)


def pack_params(params):
    """Pack (w1, b1, w2, b2, w3, b3) into one (P_ROWS, 128) f32 buffer."""
    w1, b1, w2, b2, w3, b3 = params
    p = jnp.zeros((P_ROWS, LANES), jnp.float32)
    p = p.at[W1_R:W1_R + N_STATES, :H1].set(w1)
    p = p.at[B1_R, :H1].set(b1.reshape(H1))
    p = p.at[W2_R:W2_R + H1, :H2].set(w2)
    p = p.at[B2_R, :H2].set(b2.reshape(H2))
    p = p.at[W3_R:W3_R + H2, :N_ACTIONS].set(w3)
    p = p.at[B3_R, :N_ACTIONS].set(b3.reshape(N_ACTIONS))
    return p


def net_forward(state, packed_params, *, max_tb=512):
    """state: (B, N_STATES) f32, packed_params: (P_ROWS, 128) f32 -> (B, N_ACTIONS)."""
    B = state.shape[0]
    TB = min(max_tb, _round_up(B, 8))          # batch tile, multiple of 8
    Bp = _round_up(B, TB)
    if Bp != B:
        state = jnp.pad(state, ((0, Bp - B), (0, 0)))

    out = pl.pallas_call(
        _mlp_kernel,
        out_shape=jax.ShapeDtypeStruct((Bp, N_ACTIONS), jnp.float32),
        grid=(Bp // TB,),
        in_specs=[
            pl.BlockSpec((TB, N_STATES), lambda i: (i, 0)),
            pl.BlockSpec((P_ROWS, LANES), lambda i: (0, 0)),  # resident params
        ],
        out_specs=pl.BlockSpec((TB, N_ACTIONS), lambda i: (i, 0)),
        compiler_params=pltpu.CompilerParams(
            dimension_semantics=("parallel",)),                # 2 TCs on v7x
    )(state, packed_params)
    return out[:B]


def init_params(key):
    """Mirror PyTorch nn.Linear default init; weights stored [in, out]."""
    ks = jax.random.split(key, 6)

    def linear(kw, kb, fan_in, fan_out):
        bound = 1.0 / jnp.sqrt(float(fan_in))
        w = jax.random.uniform(kw, (fan_in, fan_out), jnp.float32, -bound, bound)
        b = jax.random.uniform(kb, (fan_out,), jnp.float32, -bound, bound)
        return w, b

    w1, b1 = linear(ks[0], ks[1], N_STATES, H1)
    w2, b2 = linear(ks[2], ks[3], H1, H2)
    w3, b3 = linear(ks[4], ks[5], H2, N_ACTIONS)
    return (w1, b1, w2, b2, w3, b3)


def net_forward_ref(state, params):
    """Pure-JAX reference for correctness checking."""
    w1, b1, w2, b2, w3, b3 = params
    a = jnp.maximum(state @ w1 + b1, 0.0)
    a = jnp.maximum(a @ w2 + b2, 0.0)
    return a @ w3 + b3


if __name__ == "__main__":
    key = jax.random.PRNGKey(0)
    k_params, k_x1, k_x2 = jax.random.split(key, 3)

    params = init_params(k_params)
    packed = pack_params(params)

    # Small action-selection style batch (single grid step).
    batch = 8
    state = jax.random.normal(k_x1, (batch, N_STATES), jnp.float32)
    q = jax.block_until_ready(net_forward(state, packed))
    q_ref = net_forward_ref(state, params)
    assert q.shape == (batch, N_ACTIONS)
    assert jnp.allclose(q, q_ref, atol=1e-5, rtol=1e-5), "mismatch vs reference (small batch)"

    # Replay-buffer style batch exercising batch tiling + padding (grid > 1).
    batch2 = 200
    state2 = jax.random.normal(k_x2, (batch2, N_STATES), jnp.float32)
    q2 = jax.block_until_ready(net_forward(state2, packed, max_tb=64))
    q2_ref = net_forward_ref(state2, params)
    assert q2.shape == (batch2, N_ACTIONS)
    assert jnp.allclose(q2, q2_ref, atol=1e-5, rtol=1e-5), "mismatch vs reference (tiled batch)"

    print("KERNEL_OK")
</pallas_src>

<mosaic_0001>
module attributes {stable_mosaic.version = 11 : i64} {
  func.func @_mlp_kernel(%arg0: i32, %arg1: memref<8x3xf32, #tpu.memory_space<vmem>>, %arg2: memref<288x128xf32, #tpu.memory_space<vmem>>, %arg3: memref<8x5xf32, #tpu.memory_space<vmem>>) attributes {dimension_semantics = [#tpu.dimension_semantics<parallel>], iteration_bounds = array<i64: 1>, scalar_prefetch = 0 : i64, scratch_operands = 0 : i64, tpu.core_type = #tpu.core_type<tc>, window_params = [{transform_indices = @transform_0, window_bounds = array<i64: 8, 3>}, {pipeline_mode = #tpu.pipeline_mode<synchronous>, transform_indices = @transform_1, window_bounds = array<i64: 288, 128>}, {transform_indices = @transform_2, window_bounds = array<i64: 8, 5>}]} {
    %c0 = arith.constant 0 : index
    %c0_0 = arith.constant 0 : index
    %0 = vector.load %arg1[%c0, %c0_0] : memref<8x3xf32, #tpu.memory_space<vmem>>, vector<8x3xf32>
    %1 = vector.extract_strided_slice %0 {offsets = [0, 0], sizes = [8, 1], strides = [1, 1]} : vector<8x3xf32> to vector<8x1xf32>
    %c0_1 = arith.constant 0 : index
    %c0_2 = arith.constant 0 : index
    %2 = vector.load %arg2[%c0_1, %c0_2] : memref<288x128xf32, #tpu.memory_space<vmem>>, vector<1x128xf32>
    %3 = vector.broadcast %1 : vector<8x1xf32> to vector<8x128xf32>
    %4 = vector.broadcast %2 : vector<1x128xf32> to vector<8x128xf32>
    %5 = arith.mulf %3, %4 : vector<8x128xf32>
    %6 = vector.extract_strided_slice %0 {offsets = [0, 1], sizes = [8, 1], strides = [1, 1]} : vector<8x3xf32> to vector<8x1xf32>
    %c1 = arith.constant 1 : index
    %c0_3 = arith.constant 0 : index
    %7 = vector.load %arg2[%c1, %c0_3] : memref<288x128xf32, #tpu.memory_space<vmem>>, vector<1x128xf32>
    %8 = vector.broadcast %6 : vector<8x1xf32> to vector<8x128xf32>
    %9 = vector.broadcast %7 : vector<1x128xf32> to vector<8x128xf32>
    %10 = arith.mulf %8, %9 : vector<8x128xf32>
    %11 = arith.addf %5, %10 : vector<8x128xf32>
    %12 = vector.extract_strided_slice %0 {offsets = [0, 2], sizes = [8, 1], strides = [1, 1]} : vector<8x3xf32> to vector<8x1xf32>
    %c2 = arith.constant 2 : index
    %c0_4 = arith.constant 0 : index
    %13 = vector.load %arg2[%c2, %c0_4] : memref<288x128xf32, #tpu.memory_space<vmem>>, vector<1x128xf32>
    %14 = vector.broadcast %12 : vector<8x1xf32> to vector<8x128xf32>
    %15 = vector.broadcast %13 : vector<1x128xf32> to vector<8x128xf32>
    %16 = arith.mulf %14, %15 : vector<8x128xf32>
    %17 = arith.addf %11, %16 : vector<8x128xf32>
    %c8 = arith.constant 8 : index
    %c0_5 = arith.constant 0 : index
    %18 = vector.load %arg2[%c8, %c0_5] : memref<288x128xf32, #tpu.memory_space<vmem>>, vector<1x128xf32>
    %19 = vector.broadcast %18 : vector<1x128xf32> to vector<8x128xf32>
    %20 = arith.addf %17, %19 : vector<8x128xf32>
    %cst = arith.constant 0.000000e+00 : f32
    %21 = vector.broadcast %cst : f32 to vector<8x128xf32>
    %22 = arith.maximumf %20, %21 : vector<8x128xf32>
    %c16 = arith.constant 16 : index
    %c0_6 = arith.constant 0 : index
    %23 = vector.load %arg2[%c16, %c0_6] : memref<288x128xf32, #tpu.memory_space<vmem>>, vector<128x128xf32>
    %cst_7 = arith.constant dense<0.000000e+00> : vector<8x128xf32>
    %24 = tpu.matmul %22, %23, %cst_7 {dimension_numbers = #tpu.dot_dimension_numbers<[1], [0], [0], [1], [0, 0, 1, 1], [], []>} : vector<8x128xf32>, vector<128x128xf32>, vector<8x128xf32> -> vector<8x128xf32>
    %c144 = arith.constant 144 : index
    %c0_8 = arith.constant 0 : index
    %25 = vector.load %arg2[%c144, %c0_8] : memref<288x128xf32, #tpu.memory_space<vmem>>, vector<1x128xf32>
    %26 = vector.broadcast %25 : vector<1x128xf32> to vector<8x128xf32>
    %27 = arith.addf %24, %26 : vector<8x128xf32>
    %cst_9 = arith.constant 0.000000e+00 : f32
    %28 = vector.broadcast %cst_9 : f32 to vector<8x128xf32>
    %29 = arith.maximumf %27, %28 : vector<8x128xf32>
    %c152 = arith.constant 152 : index
    %c0_10 = arith.constant 0 : index
    %30 = vector.load %arg2[%c152, %c0_10] : memref<288x128xf32, #tpu.memory_space<vmem>>, vector<128x128xf32>
    %cst_11 = arith.constant dense<0.000000e+00> : vector<8x128xf32>
    %31 = tpu.matmul %29, %30, %cst_11 {dimension_numbers = #tpu.dot_dimension_numbers<[1], [0], [0], [1], [0, 0, 1, 1], [], []>} : vector<8x128xf32>, vector<128x128xf32>, vector<8x128xf32> -> vector<8x128xf32>
    %c280 = arith.constant 280 : index
    %c0_12 = arith.constant 0 : index
    %32 = vector.load %arg2[%c280, %c0_12] : memref<288x128xf32, #tpu.memory_space<vmem>>, vector<1x128xf32>
    %33 = vector.broadcast %32 : vector<1x128xf32> to vector<8x128xf32>
    %34 = arith.addf %31, %33 : vector<8x128xf32>
    %35 = vector.extract_strided_slice %34 {offsets = [0, 0], sizes = [8, 5], strides = [1, 1]} : vector<8x128xf32> to vector<8x5xf32>
    %c0_13 = arith.constant 0 : index
    %c0_14 = arith.constant 0 : index
    %36 = vector.load %arg3[%c0_13, %c0_14] : memref<8x5xf32, #tpu.memory_space<vmem>>, vector<8x5xf32>
    tpu.vector_store %arg3[%c0_13, %c0_14], %35 {strides = array<i32>} : memref<8x5xf32, #tpu.memory_space<vmem>>, vector<8x5xf32>,
    return
  }
  func.func @transform_0(%arg0: i32) -> (i32, i32) {
    %c0_i32 = arith.constant 0 : i32
    %c0_i32_0 = arith.constant 0 : i32
    return %arg0, %c0_i32 : i32, i32
  }
  func.func @transform_1(%arg0: i32) -> (i32, i32) {
    %c0_i32 = arith.constant 0 : i32
    %c0_i32_0 = arith.constant 0 : i32
    %c0_i32_1 = arith.constant 0 : i32
    return %c0_i32, %c0_i32_0 : i32, i32
  }
  func.func @transform_2(%arg0: i32) -> (i32, i32) {
    %c0_i32 = arith.constant 0 : i32
    %c0_i32_0 = arith.constant 0 : i32
    return %arg0, %c0_i32 : i32, i32
  }
}

</mosaic_0001>

<llo_original>
// kernel: tpu_custom_call.1
$region0: #{tpu_custom_call.1}
  #allocation0 [shape = 'u32[]', space=smem, size = 0x4, offset = 0x4, fixed_abs, tag = 'smem constant byte address 0x4 - core index']
  #allocation1 [shape = 'u32[144,128]{1,0:T(1,128)}', space=vmem, size = 0x12000, scoped, tag = 'internal scratch']
  %s0 = inlined_call_operand.vmem [shape: f32[8,3], index: 0, kind: input, shape index: {}]
  %s1 = inlined_call_operand.hbm [shape: f32[288,128], index: 1, kind: input, shape index: {}]
  %s2 = inlined_call_operand.hbm [shape: f32[8,5], index: 2, kind: output, shape index: {}]
  %s3 = sld [smem:[#allocation0]]
  $region22: #{tpu_custom_call.1} parent=0
    _
  %s5 = ssub.s32 1, %s3
  %s6 = scalar_select 0, %s5, %s3
  $region1: #{tpu_custom_call.1} parent=0
    #allocation2 [shape = 'u8[147456]{0}', space=vmem, size = 0x24000, scoped, tag = 'input window, operand 1, single buffered']
    #allocation3 [shape = 's32[1]{0}', space=sflag, size = 0x4, scoped, tag = 'scoped memory for tpu_custom_call.1']
    #allocation4 [shape = 's32[1]{0}', space=sflag, size = 0x4, scoped, tag = 'scoped memory for tpu_custom_call.1']
    #allocation5 [shape = 'u8[4096]{0}', space=vmem, size = 0x1000, scoped, tag = 'output window, operand 0, single buffered']
    %7 = vsyncpa [#allocation3], 0
    %8 = vsyncpa [#allocation4], 0
    // Predicated region
    $region2: #{tpu_custom_call.1} parent=1 // pred_check
      _
    $region3: #{tpu_custom_call.1} parent=1 // pred_check_branch
      %10 = sbr.rel (0) target = $region5
    $region4: #{tpu_custom_call.1} parent=1 // pred_region
      _
    $region5: #{tpu_custom_call.1} parent=1 // pred_fallthru
      _
    // Predicated region
    $region6: #{tpu_custom_call.1} parent=1 // pred_check
      _
    $region7: #{tpu_custom_call.1} parent=1 // pred_check_branch
      %12 = sbr.rel (0) target = $region9
    $region8: #{tpu_custom_call.1} parent=1 // pred_region
      %s14 = ssub.s32 4608, 4608
      %15 = vsyncadd [#allocation3], %s14
      %s16 = sshll.u32 [#allocation2], 4
      %s17 = int_to_ptr.vmem [resolvable:$true] %s16
      %22 = dma.hbm_to_vmem [thread:$0]  %s1, 4608, %s17, [#allocation3], 128, 128, 8
    $region9: #{tpu_custom_call.1} parent=1 // pred_fallthru
      _
    // Predicated region
    $region10: #{tpu_custom_call.1} parent=1 // pred_check
      _
    $region11: #{tpu_custom_call.1} parent=1 // pred_check_branch
      %24 = sbr.rel (0) target = $region13
    $region12: #{tpu_custom_call.1} parent=1 // pred_region
      %25 = dma.done [#allocation3], 4608
    $region13: #{tpu_custom_call.1} parent=1 // pred_fallthru
      _
    %v26 = vld [vmem:[%s0] sm:$0xff]
    %v27 = vld [vmem:[#allocation2] sm:$0x1]
    %29 = vset.pattern.permute.xlu0 0
    %30 = vperm.xlu0 %29, %v26
    %v31 = vpop.permute.xlu0 %30
    %v33 = vlaneseq
    %v34 = vshrl.u32 %v33, 7
    %v35 = vsub.s32 0, %v34
    %v36 = vrot.slane %v27, %v35
    %v37 = vmul.f32 %v31, %v36
    %v38 = vld [vmem:[#allocation2 + $0x1] sm:$0x1]
    %39 = vset.pattern.permute.xlu0 1
    %40 = vperm.xlu0 %39, %v26
    %v41 = vpop.permute.xlu0 %40
    %v43 = vlaneseq
    %v44 = vshrl.u32 %v43, 7
    %v45 = vsub.s32 0, %v44
    %v46 = vrot.slane %v38, %v45
    %v47 = vmul.f32 %v41, %v46
    %v48 = vadd.f32 %v37, %v47
    %v49 = vld [vmem:[#allocation2 + $0x2] sm:$0x1]
    %50 = vset.pattern.permute.xlu0 2
    %51 = vperm.xlu0 %50, %v26
    %v52 = vpop.permute.xlu0 %51
    %v54 = vlaneseq
    %v55 = vshrl.u32 %v54, 7
    %v56 = vsub.s32 0, %v55
    %v57 = vrot.slane %v49, %v56
    %v58 = vmul.f32 %v52, %v57
    %v59 = vadd.f32 %v48, %v58
    %v60 = vld [vmem:[#allocation2 + $0x8] sm:$0x1]
    %v61 = vlaneseq
    %v62 = vshrl.u32 %v61, 7
    %v63 = vsub.s32 0, %v62
    %v64 = vrot.slane %v60, %v63
    %v65 = vadd.f32 %v59, %v64
    %v66 = vmax.f32 %v65, 0.0
    %v67 = vld [vmem:[#allocation2 + $0x10] sm:$0xff]
    %v68 = vld [vmem:[#allocation2 + $0x18] sm:$0xff]
    %v69 = vld [vmem:[#allocation2 + $0x20] sm:$0xff]
    %v70 = vld [vmem:[#allocation2 + $0x28] sm:$0xff]
    %v71 = vld [vmem:[#allocation2 + $0x30] sm:$0xff]
    %v72 = vld [vmem:[#allocation2 + $0x38] sm:$0xff]
    %v73 = vld [vmem:[#allocation2 + $0x40] sm:$0xff]
    %v74 = vld [vmem:[#allocation2 + $0x48] sm:$0xff]
    %v75 = vld [vmem:[#allocation2 + $0x50] sm:$0xff]
    %v76 = vld [vmem:[#allocation2 + $0x58] sm:$0xff]
    %v77 = vld [vmem:[#allocation2 + $0x60] sm:$0xff]
    %v78 = vld [vmem:[#allocation2 + $0x68] sm:$0xff]
    %v79 = vld [vmem:[#allocation2 + $0x70] sm:$0xff]
    %v80 = vld [vmem:[#allocation2 + $0x78] sm:$0xff]
    %v81 = vld [vmem:[#allocation2 + $0x80] sm:$0xff]
    %v82 = vld [vmem:[#allocation2 + $0x88] sm:$0xff]
    %v83 = vld [vmem:[#allocation2 + $0x90] sm:$0x1]
    %v84 = vlaneseq
    %v85 = vshrl.u32 %v84, 7
    %v86 = vsub.s32 0, %v85
    %v87 = vrot.slane %v83, %v86
    %88 = vmatprep.subr.mxu0 0.0
    %89 = vmatpush1.msra.mxu0 %v67
    %90 = vmatprep.subr.mxu0 0.0
    %91 = vmatpush1.msra.mxu0 %v68
    %92 = vmatprep.subr.mxu0 0.0
    %93 = vmatpush1.msra.mxu0 %v69
    %94 = vmatprep.subr.mxu0 0.0
    %95 = vmatpush1.msra.mxu0 %v70
    %96 = vmatprep.subr.mxu0 0.0
    %97 = vmatpush1.msra.mxu0 %v71
    %98 = vmatprep.subr.mxu0 0.0
    %99 = vmatpush1.msra.mxu0 %v72
    %100 = vmatprep.subr.mxu0 0.0
    %101 = vmatpush1.msra.mxu0 %v73
    %102 = vmatprep.subr.mxu0 0.0
    %103 = vmatpush1.msra.mxu0 %v74
    %104 = vmatprep.subr.mxu0 0.0
    %105 = vmatpush1.msra.mxu0 %v75
    %106 = vmatprep.subr.mxu0 0.0
    %107 = vmatpush1.msra.mxu0 %v76
    %108 = vmatprep.subr.mxu0 0.0
    %109 = vmatpush1.msra.mxu0 %v77
    %110 = vmatprep.subr.mxu0 0.0
    %111 = vmatpush1.msra.mxu0 %v78
    %112 = vmatprep.subr.mxu0 0.0
    %113 = vmatpush1.msra.mxu0 %v79
    %114 = vmatprep.subr.mxu0 0.0
    %115 = vmatpush1.msra.mxu0 %v80
    %116 = vmatprep.subr.mxu0 0.0
    %117 = vmatpush1.msra.mxu0 %v81
    %118 = vmatprep.subr.mxu0 0.0
    %119 = vmatpush1.msra.mxu0 %v82
    %120 = vmatprep.subr.mxu0 0.0
    %121 = vmatpush1.msra.mxu0 0.0
    %122 = vmatprep.subr.mxu0 0.0
    %123 = vmatpush1.msra.mxu0 0.0
    %124 = vmatprep.subr.mxu0 0.0
    %125 = vmatpush1.msra.mxu0 0.0
    %126 = vmatprep.subr.mxu0 0.0
    %127 = vmatpush1.msra.mxu0 0.0
    %128 = vmatprep.subr.mxu0 0.0
    %129 = vmatpush1.msra.mxu0 0.0
    %130 = vmatprep.subr.mxu0 0.0
    %131 = vmatpush1.msra.mxu0 0.0
    %132 = vmatprep.subr.mxu0 0.0
    %133 = vmatpush1.msra.mxu0 0.0
    %134 = vmatprep.subr.mxu0 0.0
    %135 = vmatpush1.msra.mxu0 0.0
    %136 = vmatprep.subr.mxu0 0.0
    %137 = vmatpush1.msra.mxu0 0.0
    %138 = vmatprep.subr.mxu0 0.0
    %139 = vmatpush1.msra.mxu0 0.0
    %140 = vmatprep.subr.mxu0 0.0
    %141 = vmatpush1.msra.mxu0 0.0
    %142 = vmatprep.subr.mxu0 0.0
    %143 = vmatpush1.msra.mxu0 0.0
    %144 = vmatprep.subr.mxu0 0.0
    %145 = vmatpush1.msra.mxu0 0.0
    %146 = vmatprep.subr.mxu0 0.0
    %147 = vmatpush1.msra.mxu0 0.0
    %148 = vmatprep.subr.mxu0 0.0
    %149 = vmatpush1.msra.mxu0 0.0
    %150 = vmatprep.subr.mxu0 0.0
    %151 = vmatpush1.msra.mxu0 0.0
    %152 = vmatprep.mubr.f32.mxu0 0.0
    %153 = vmatmul.mubr.f32.gmra.mrb[0].mxu0 %v66
    %v154 = vpop.f32.mrb[0].mxu0
    %v155 = vadd.f32 %v87, %v154
    %v156 = vpop.f32.mrb[0].mxu0
    %157 = vdwg.mxu0
    %v158 = vmax.f32 %v155, 0.0
    %v159 = vld [vmem:[#allocation2 + $0x98] sm:$0xff]
    %v160 = vld [vmem:[#allocation2 + $0xa0] sm:$0xff]
    %v161 = vld [vmem:[#allocation2 + $0xa8] sm:$0xff]
    %v162 = vld [vmem:[#allocation2 + $0xb0] sm:$0xff]
    %v163 = vld [vmem:[#allocation2 + $0xb8] sm:$0xff]
    %v164 = vld [vmem:[#allocation2 + $0xc0] sm:$0xff]
    %v165 = vld [vmem:[#allocation2 + $0xc8] sm:$0xff]
    %v166 = vld [vmem:[#allocation2 + $0xd0] sm:$0xff]
    %v167 = vld [vmem:[#allocation2 + $0xd8] sm:$0xff]
    %v168 = vld [vmem:[#allocation2 + $0xe0] sm:$0xff]
    %v169 = vld [vmem:[#allocation2 + $0xe8] sm:$0xff]
    %v170 = vld [vmem:[#allocation2 + $0xf0] sm:$0xff]
    %v171 = vld [vmem:[#allocation2 + $0xf8] sm:$0xff]
    %v172 = vld [vmem:[#allocation2 + $0x100] sm:$0xff]
    %v173 = vld [vmem:[#allocation2 + $0x108] sm:$0xff]
    %v174 = vld [vmem:[#allocation2 + $0x110] sm:$0xff]
    %v175 = vld [vmem:[#allocation2 + $0x118] sm:$0x1]
    %v176 = vlaneseq
    %v177 = vshrl.u32 %v176, 7
    %v178 = vsub.s32 0, %v177
    %v179 = vrot.slane %v175, %v178
    %180 = vmatprep.subr.mxu0 0.0
    %181 = vmatpush1.msra.mxu0 %v159
    %182 = vmatprep.subr.mxu0 0.0
    %183 = vmatpush1.msra.mxu0 %v160
    %184 = vmatprep.subr.mxu0 0.0
    %185 = vmatpush1.msra.mxu0 %v161
    %186 = vmatprep.subr.mxu0 0.0
    %187 = vmatpush1.msra.mxu0 %v162
    %188 = vmatprep.subr.mxu0 0.0
    %189 = vmatpush1.msra.mxu0 %v163
    %190 = vmatprep.subr.mxu0 0.0
    %191 = vmatpush1.msra.mxu0 %v164
    %192 = vmatprep.subr.mxu0 0.0
    %193 = vmatpush1.msra.mxu0 %v165
    %194 = vmatprep.subr.mxu0 0.0
    %195 = vmatpush1.msra.mxu0 %v166
    %196 = vmatprep.subr.mxu0 0.0
    %197 = vmatpush1.msra.mxu0 %v167
    %198 = vmatprep.subr.mxu0 0.0
    %199 = vmatpush1.msra.mxu0 %v168
    %200 = vmatprep.subr.mxu0 0.0
    %201 = vmatpush1.msra.mxu0 %v169
    %202 = vmatprep.subr.mxu0 0.0
    %203 = vmatpush1.msra.mxu0 %v170
    %204 = vmatprep.subr.mxu0 0.0
    %205 = vmatpush1.msra.mxu0 %v171
    %206 = vmatprep.subr.mxu0 0.0
    %207 = vmatpush1.msra.mxu0 %v172
    %208 = vmatprep.subr.mxu0 0.0
    %209 = vmatpush1.msra.mxu0 %v173
    %210 = vmatprep.subr.mxu0 0.0
    %211 = vmatpush1.msra.mxu0 %v174
    %212 = vmatprep.subr.mxu0 0.0
    %213 = vmatpush1.msra.mxu0 0.0
    %214 = vmatprep.subr.mxu0 0.0
    %215 = vmatpush1.msra.mxu0 0.0
    %216 = vmatprep.subr.mxu0 0.0
    %217 = vmatpush1.msra.mxu0 0.0
    %218 = vmatprep.subr.mxu0 0.0
    %219 = vmatpush1.msra.mxu0 0.0
    %220 = vmatprep.subr.mxu0 0.0
    %221 = vmatpush1.msra.mxu0 0.0
    %222 = vmatprep.subr.mxu0 0.0
    %223 = vmatpush1.msra.mxu0 0.0
    %224 = vmatprep.subr.mxu0 0.0
    %225 = vmatpush1.msra.mxu0 0.0
    %226 = vmatprep.subr.mxu0 0.0
    %227 = vmatpush1.msra.mxu0 0.0
    %228 = vmatprep.subr.mxu0 0.0
    %229 = vmatpush1.msra.mxu0 0.0
    %230 = vmatprep.subr.mxu0 0.0
    %231 = vmatpush1.msra.mxu0 0.0
    %232 = vmatprep.subr.mxu0 0.0
    %233 = vmatpush1.msra.mxu0 0.0
    %234 = vmatprep.subr.mxu0 0.0
    %235 = vmatpush1.msra.mxu0 0.0
    %236 = vmatprep.subr.mxu0 0.0
    %237 = vmatpush1.msra.mxu0 0.0
    %238 = vmatprep.subr.mxu0 0.0
    %239 = vmatpush1.msra.mxu0 0.0
    %240 = vmatprep.subr.mxu0 0.0
    %241 = vmatpush1.msra.mxu0 0.0
    %242 = vmatprep.subr.mxu0 0.0
    %243 = vmatpush1.msra.mxu0 0.0
    %244 = vmatprep.mubr.f32.mxu0 0.0
    %245 = vmatmul.mubr.f32.gmra.mrb[0].mxu0 %v158
    %v246 = vpop.f32.mrb[0].mxu0
    %v247 = vadd.f32 %v179, %v246
    %v248 = vpop.f32.mrb[0].mxu0
    %249 = vdwg.mxu0
    %vm250 = vcmask 39936
    %251 = vst.msk [vmem:[#allocation5] sm:$0xff] %vm250, %v247
    // Predicated region
    $region14: #{tpu_custom_call.1} parent=1 // pred_check
      _
    $region15: #{tpu_custom_call.1} parent=1 // pred_check_branch
      %253 = sbr.rel (0) target = $region17
    $region16: #{tpu_custom_call.1} parent=1 // pred_region
      %s255 = ssub.s32 128, 128
      %256 = vsyncadd [#allocation4], %s255
      %s258 = sshll.u32 [#allocation5], 4
      %s259 = int_to_ptr.vmem [resolvable:$true] %s258
      %261 = dma.vmem_to_hbm [thread:$0]  %s259, 128, %s2, [#allocation4]
    $region17: #{tpu_custom_call.1} parent=1 // pred_fallthru
      _
    // Predicated region
    $region18: #{tpu_custom_call.1} parent=1 // pred_check
      _
    $region19: #{tpu_custom_call.1} parent=1 // pred_check_branch
      %263 = sbr.rel (0) target = $region21
    $region20: #{tpu_custom_call.1} parent=1 // pred_region
      %264 = dma.done [#allocation4], 128
    $region21: #{tpu_custom_call.1} parent=1 // pred_fallthru
      _
    %265 = vsyncpa [#allocation3], 1
    %266 = vsyncpa [#allocation4], 1

</llo_original>
